<compile_context>
chip_gen: v7x
topology: tpu7x:2x2x1
jax: 0.10.0
libtpu: 0.0.40
codegen_flags: <defaults>
</compile_context>

<pallas_src>
import jax
import jax.numpy as jnp
from jax.experimental import pallas as pl
from jax.experimental.pallas import tpu as pltpu


def _round_up(x, m):
    return ((x + m - 1) // m) * m


def _coupling_kernel(x_ref, w1_ref, b1_ref, w2_ref, b2_ref, out_ref):
    # x: (tb, 2n) activations; w1: (2n, h_pad) bf16; w2: (h_pad, n) bf16; biases f32.
    x = x_ref[...].astype(w1_ref.dtype)
    h = jnp.dot(x, w1_ref[...], preferred_element_type=jnp.float32) + b1_ref[...]
    h = jnp.maximum(h, 0.0)                                   # ReLU in f32 (VPU)
    y = jnp.dot(h.astype(w2_ref.dtype), w2_ref[...],
                preferred_element_type=jnp.float32) + b2_ref[...]
    out_ref[...] = jnp.tanh(y).astype(out_ref.dtype)          # Tanh in f32 (EUP)


def prepare_coupling_params(w1, b1, w2, b2, *, matmul_dtype=jnp.bfloat16):
    """Pad + cast the weights once (call at init, not per forward).

    w1: [2n, 2n], b1: [2n], w2: [2n, n], b2: [n]  ([in, out] layout).
    Hidden dim is zero-padded to a multiple of 128 (padded lanes stay 0 through
    ReLU; padded W2 rows are 0 so they contribute nothing).  The output dim of W2
    is NOT padded -- the kernel writes the true n-wide result.
    """
    two_n = w1.shape[0]
    n = w2.shape[1]
    assert w1.shape == (two_n, two_n) and b1.shape == (two_n,)
    assert w2.shape == (two_n, n) and b2.shape == (n,)
    h_pad = _round_up(two_n, 128)
    w1p = jnp.pad(w1, ((0, 0), (0, h_pad - two_n))).astype(matmul_dtype)      # [2n, h_pad]
    b1p = jnp.pad(b1, (0, h_pad - two_n)).astype(jnp.float32).reshape(1, h_pad)
    w2p = jnp.pad(w2, ((0, h_pad - two_n), (0, 0))).astype(matmul_dtype)      # [h_pad, n]
    b2p = b2.astype(jnp.float32).reshape(1, n)
    return w1p, b1p, w2p, b2p


def nonlinear_coupling(gpcm_betas, coral_taus, prepared_params, *, batch_tile=4096):
    """Pallas equivalent of NonlinearCoupling.forward.

    Returns (coupled, {'interaction_features': combined_input}) like the PyTorch module.
    Note: for very small B the fixed pallas_call launch cost dominates; this path is
    tuned for large B, but remains correct at any B.
    """
    w1p, b1p, w2p, b2p = prepared_params
    B, n = gpcm_betas.shape
    two_n = 2 * n
    h_pad = w1p.shape[1]
    assert coral_taus.shape == (B, n)
    assert w1p.shape == (two_n, h_pad) and b1p.shape == (1, h_pad)
    assert w2p.shape == (h_pad, n) and b2p.shape == (1, n)

    # The concat is a module output anyway; feed it straight to the kernel (single
    # layer-1 matmul, one activation DMA stream).
    combined = jnp.concatenate([gpcm_betas, coral_taus], axis=-1)             # [B, 2n]

    # Batch tile selection:
    #  * B > batch_tile: stream sublane-aligned tiles of ~batch_tile rows.
    #  * B <= batch_tile: still split into >=2 grid steps (multiple of 8) when possible,
    #    so both v7x TensorCores get work; tiny B falls back to a single full-extent tile.
    # VMEM: double-buffered (tb, 2n) input + (tb, n) output f32 plus tiny resident bf16
    # weights -- well under the 32 MiB scoped default on v5e/v6e/v7x.
    if B > batch_tile:
        tb = max(8, (batch_tile // 8) * 8)
    else:
        half = _round_up((B + 1) // 2, 8)
        tb = B if half >= B else half
    grid = (pl.cdiv(B, tb),)

    out_dtype = gpcm_betas.dtype
    flops = 2 * B * two_n * h_pad + 2 * B * h_pad * n
    bytes_accessed = (
        B * two_n * combined.dtype.itemsize                 # activations in
        + (two_n * h_pad + h_pad * n) * w1p.dtype.itemsize  # bf16 weights
        + (h_pad + n) * 4                                   # f32 biases
        + B * n * jnp.dtype(out_dtype).itemsize             # unpadded output
    )
    cost = pl.CostEstimate(flops=flops, transcendentals=B * n,
                           bytes_accessed=bytes_accessed)

    coupled = pl.pallas_call(
        _coupling_kernel,
        out_shape=jax.ShapeDtypeStruct((B, n), out_dtype),
        grid=grid,
        in_specs=[
            pl.BlockSpec((tb, two_n), lambda i: (i, 0)),     # combined input (streams)
            pl.BlockSpec((two_n, h_pad), lambda i: (0, 0)),  # W1 (VMEM-resident, bf16)
            pl.BlockSpec((1, h_pad), lambda i: (0, 0)),      # b1 (f32)
            pl.BlockSpec((h_pad, n), lambda i: (0, 0)),      # W2 (VMEM-resident, bf16)
            pl.BlockSpec((1, n), lambda i: (0, 0)),          # b2 (f32)
        ],
        out_specs=pl.BlockSpec((tb, n), lambda i: (i, 0)),   # unpadded (B, n) output
        compiler_params=pltpu.CompilerParams(
            dimension_semantics=("parallel",)),              # v7x: shard batch over 2 TCs
        cost_estimate=cost,
    )(combined, w1p, b1p, w2p, b2p)

    return coupled, {"interaction_features": combined}


def init_params(key, n_thresholds, dtype=jnp.float32):
    """Deterministic parameter init matching nn.Linear shapes ([in, out] layout)."""
    two_n = 2 * n_thresholds
    k1, k2, k3, k4 = jax.random.split(key, 4)
    bound1 = 1.0 / jnp.sqrt(two_n)
    w1 = jax.random.uniform(k1, (two_n, two_n), dtype, -bound1, bound1)
    b1 = jax.random.uniform(k2, (two_n,), dtype, -bound1, bound1)
    bound2 = 1.0 / jnp.sqrt(two_n)
    w2 = jax.random.uniform(k3, (two_n, n_thresholds), dtype, -bound2, bound2)
    b2 = jax.random.uniform(k4, (n_thresholds,), dtype, -bound2, bound2)
    return w1, b1, w2, b2


if __name__ == "__main__":
    key = jax.random.PRNGKey(0)
    batch = 2
    n_thresholds = 8

    k_in1, k_in2, k_params = jax.random.split(key, 3)
    gpcm_betas = jax.random.normal(k_in1, (batch, n_thresholds), jnp.float32)
    coral_taus = jax.random.normal(k_in2, (batch, n_thresholds), jnp.float32)

    w1, b1, w2, b2 = init_params(k_params, n_thresholds)
    prepared = prepare_coupling_params(w1, b1, w2, b2)       # pad + cast once (init time)

    coupled, aux = nonlinear_coupling(gpcm_betas, coral_taus, prepared)
    jax.block_until_ready(coupled)
    jax.block_until_ready(aux["interaction_features"])

    assert coupled.shape == (batch, n_thresholds)
    assert aux["interaction_features"].shape == (batch, 2 * n_thresholds)

    # Reference 1: plain f32 math (same as the PyTorch module) -- loose tol (bf16 MXU).
    combined_ref = jnp.concatenate([gpcm_betas, coral_taus], axis=-1)
    h32 = jnp.maximum(combined_ref @ w1 + b1, 0.0)
    coupled_f32 = jnp.tanh(h32 @ w2 + b2)
    assert jnp.allclose(coupled, coupled_f32, atol=5e-2, rtol=5e-2)

    # Reference 2: same bf16-operand / f32-accumulate math as the kernel -- tight tol.
    mdt = jnp.bfloat16
    h_ref = jnp.dot(combined_ref.astype(mdt), w1.astype(mdt),
                    preferred_element_type=jnp.float32) + b1
    h_ref = jnp.maximum(h_ref, 0.0)
    coupled_bf16 = jnp.tanh(
        jnp.dot(h_ref.astype(mdt), w2.astype(mdt), preferred_element_type=jnp.float32) + b2
    )
    assert jnp.allclose(coupled, coupled_bf16, atol=1e-4, rtol=1e-4)
    assert jnp.allclose(aux["interaction_features"], combined_ref)

    print("KERNEL_OK")
</pallas_src>

<mosaic_0001>
module attributes {stable_mosaic.version = 11 : i64} {
  func.func @_coupling_kernel(%arg0: i32, %arg1: memref<2x16xf32, #tpu.memory_space<vmem>>, %arg2: memref<16x128xbf16, #tpu.memory_space<vmem>>, %arg3: memref<1x128xf32, #tpu.memory_space<vmem>>, %arg4: memref<128x8xbf16, #tpu.memory_space<vmem>>, %arg5: memref<1x8xf32, #tpu.memory_space<vmem>>, %arg6: memref<2x8xf32, #tpu.memory_space<vmem>>) attributes {dimension_semantics = [#tpu.dimension_semantics<parallel>], iteration_bounds = array<i64: 1>, scalar_prefetch = 0 : i64, scratch_operands = 0 : i64, tpu.core_type = #tpu.core_type<tc>, window_params = [{transform_indices = @transform_0, window_bounds = array<i64: 2, 16>}, {pipeline_mode = #tpu.pipeline_mode<synchronous>, transform_indices = @transform_1, window_bounds = array<i64: 16, 128>}, {pipeline_mode = #tpu.pipeline_mode<synchronous>, transform_indices = @transform_2, window_bounds = array<i64: 1, 128>}, {pipeline_mode = #tpu.pipeline_mode<synchronous>, transform_indices = @transform_3, window_bounds = array<i64: 128, 8>}, {pipeline_mode = #tpu.pipeline_mode<synchronous>, transform_indices = @transform_4, window_bounds = array<i64: 1, 8>}, {transform_indices = @transform_5, window_bounds = array<i64: 2, 8>}]} {
    %c0 = arith.constant 0 : index
    %c0_0 = arith.constant 0 : index
    %0 = vector.load %arg1[%c0, %c0_0] : memref<2x16xf32, #tpu.memory_space<vmem>>, vector<2x16xf32>
    %1 = arith.truncf %0 : vector<2x16xf32> to vector<2x16xbf16>
    %c0_1 = arith.constant 0 : index
    %c0_2 = arith.constant 0 : index
    %2 = vector.load %arg2[%c0_1, %c0_2] : memref<16x128xbf16, #tpu.memory_space<vmem>>, vector<16x128xbf16>
    %cst = arith.constant dense<0.000000e+00> : vector<2x128xf32>
    %3 = tpu.matmul %1, %2, %cst {dimension_numbers = #tpu.dot_dimension_numbers<[1], [0], [0], [1], [0, 0, 1, 1], [], []>} : vector<2x16xbf16>, vector<16x128xbf16>, vector<2x128xf32> -> vector<2x128xf32>
    %c0_3 = arith.constant 0 : index
    %c0_4 = arith.constant 0 : index
    %4 = vector.load %arg3[%c0_3, %c0_4] : memref<1x128xf32, #tpu.memory_space<vmem>>, vector<1x128xf32>
    %5 = vector.broadcast %4 : vector<1x128xf32> to vector<2x128xf32>
    %6 = arith.addf %3, %5 : vector<2x128xf32>
    %cst_5 = arith.constant 0.000000e+00 : f32
    %7 = vector.broadcast %cst_5 : f32 to vector<2x128xf32>
    %8 = arith.maximumf %6, %7 : vector<2x128xf32>
    %9 = arith.truncf %8 : vector<2x128xf32> to vector<2x128xbf16>
    %c0_6 = arith.constant 0 : index
    %c0_7 = arith.constant 0 : index
    %10 = vector.load %arg4[%c0_6, %c0_7] : memref<128x8xbf16, #tpu.memory_space<vmem>>, vector<128x8xbf16>
    %cst_8 = arith.constant dense<0.000000e+00> : vector<2x8xf32>
    %11 = tpu.matmul %9, %10, %cst_8 {dimension_numbers = #tpu.dot_dimension_numbers<[1], [0], [0], [1], [0, 0, 1, 1], [], []>} : vector<2x128xbf16>, vector<128x8xbf16>, vector<2x8xf32> -> vector<2x8xf32>
    %c0_9 = arith.constant 0 : index
    %c0_10 = arith.constant 0 : index
    %12 = vector.load %arg5[%c0_9, %c0_10] : memref<1x8xf32, #tpu.memory_space<vmem>>, vector<1x8xf32>
    %13 = vector.broadcast %12 : vector<1x8xf32> to vector<2x8xf32>
    %14 = arith.addf %11, %13 : vector<2x8xf32>
    %15 = math.tanh %14 : vector<2x8xf32>
    %c0_11 = arith.constant 0 : index
    %c0_12 = arith.constant 0 : index
    %16 = vector.load %arg6[%c0_11, %c0_12] : memref<2x8xf32, #tpu.memory_space<vmem>>, vector<2x8xf32>
    tpu.vector_store %arg6[%c0_11, %c0_12], %15 {strides = array<i32>} : memref<2x8xf32, #tpu.memory_space<vmem>>, vector<2x8xf32>,
    return
  }
  func.func @transform_0(%arg0: i32) -> (i32, i32) {
    %c0_i32 = arith.constant 0 : i32
    %c0_i32_0 = arith.constant 0 : i32
    return %arg0, %c0_i32 : i32, i32
  }
  func.func @transform_1(%arg0: i32) -> (i32, i32) {
    %c0_i32 = arith.constant 0 : i32
    %c0_i32_0 = arith.constant 0 : i32
    %c0_i32_1 = arith.constant 0 : i32
    return %c0_i32, %c0_i32_0 : i32, i32
  }
  func.func @transform_2(%arg0: i32) -> (i32, i32) {
    %c0_i32 = arith.constant 0 : i32
    %c0_i32_0 = arith.constant 0 : i32
    %c0_i32_1 = arith.constant 0 : i32
    return %c0_i32, %c0_i32_0 : i32, i32
  }
  func.func @transform_3(%arg0: i32) -> (i32, i32) {
    %c0_i32 = arith.constant 0 : i32
    %c0_i32_0 = arith.constant 0 : i32
    %c0_i32_1 = arith.constant 0 : i32
    return %c0_i32, %c0_i32_0 : i32, i32
  }
  func.func @transform_4(%arg0: i32) -> (i32, i32) {
    %c0_i32 = arith.constant 0 : i32
    %c0_i32_0 = arith.constant 0 : i32
    %c0_i32_1 = arith.constant 0 : i32
    return %c0_i32, %c0_i32_0 : i32, i32
  }
  func.func @transform_5(%arg0: i32) -> (i32, i32) {
    %c0_i32 = arith.constant 0 : i32
    %c0_i32_0 = arith.constant 0 : i32
    return %arg0, %c0_i32 : i32, i32
  }
}

</mosaic_0001>

<llo_original>
// kernel: tpu_custom_call.1
$region0: #{tpu_custom_call.1}
  #allocation0 [shape = 'u32[]', space=smem, size = 0x4, offset = 0x4, fixed_abs, tag = 'smem constant byte address 0x4 - core index']
  #allocation1 [shape = 'u32[144,128]{1,0:T(1,128)}', space=vmem, size = 0x12000, scoped, tag = 'internal scratch']
  %s0 = inlined_call_operand.vmem [shape: f32[2,16], index: 0, kind: input, shape index: {}]
  %s1 = inlined_call_operand.vmem [shape: bf16[16,128], index: 1, kind: input, shape index: {}]
  %s2 = inlined_call_operand.vmem [shape: f32[1,128], index: 2, kind: input, shape index: {}]
  %s3 = inlined_call_operand.vmem [shape: bf16[128,8], index: 3, kind: input, shape index: {}]
  %s4 = inlined_call_operand.vmem [shape: f32[1,8], index: 4, kind: input, shape index: {}]
  %s5 = inlined_call_operand.hbm [shape: f32[2,8], index: 5, kind: output, shape index: {}]
  %s6 = sld [smem:[#allocation0]]
  $region30: #{tpu_custom_call.1} parent=0
    _
  %s8 = ssub.s32 1, %s6
  %s9 = scalar_select 0, %s8, %s6
  $region1: #{tpu_custom_call.1} parent=0
    #allocation2 [shape = 'u8[1024]{0}', space=vmem, size = 0x400, scoped, tag = 'output window, operand 0, single buffered']
    #allocation3 [shape = 's32[1]{0}', space=sflag, size = 0x4, scoped, tag = 'scoped memory for tpu_custom_call.1']
    %10 = vsyncpa [#allocation3], 0
    // Predicated region
    $region2: #{tpu_custom_call.1} parent=1 // pred_check
      _
    $region3: #{tpu_custom_call.1} parent=1 // pred_check_branch
      %12 = sbr.rel (0) target = $region5
    $region4: #{tpu_custom_call.1} parent=1 // pred_region
      _
    $region5: #{tpu_custom_call.1} parent=1 // pred_fallthru
      _
    // Predicated region
    $region6: #{tpu_custom_call.1} parent=1 // pred_check
      _
    $region7: #{tpu_custom_call.1} parent=1 // pred_check_branch
      %14 = sbr.rel (0) target = $region9
    $region8: #{tpu_custom_call.1} parent=1 // pred_region
      _
    $region9: #{tpu_custom_call.1} parent=1 // pred_fallthru
      _
    // Predicated region
    $region10: #{tpu_custom_call.1} parent=1 // pred_check
      _
    $region11: #{tpu_custom_call.1} parent=1 // pred_check_branch
      %16 = sbr.rel (0) target = $region13
    $region12: #{tpu_custom_call.1} parent=1 // pred_region
      _
    $region13: #{tpu_custom_call.1} parent=1 // pred_fallthru
      _
    // Predicated region
    $region14: #{tpu_custom_call.1} parent=1 // pred_check
      _
    $region15: #{tpu_custom_call.1} parent=1 // pred_check_branch
      %18 = sbr.rel (0) target = $region17
    $region16: #{tpu_custom_call.1} parent=1 // pred_region
      _
    $region17: #{tpu_custom_call.1} parent=1 // pred_fallthru
      _
    // Predicated region
    $region18: #{tpu_custom_call.1} parent=1 // pred_check
      _
    $region19: #{tpu_custom_call.1} parent=1 // pred_check_branch
      %20 = sbr.rel (0) target = $region21
    $region20: #{tpu_custom_call.1} parent=1 // pred_region
      _
    $region21: #{tpu_custom_call.1} parent=1 // pred_fallthru
      _
    %v22 = vld [vmem:[%s0] sm:$0x3]
    %v23 = vpack.c.bf16 %v22, %v22
    %v24 = vld [vmem:[%s1] sm:$0xf]
    %v25 = vld [vmem:[%s1 + $0x4] sm:$0xf]
    %v26 = vld [vmem:[%s2] sm:$0x1]
    %v28 = vlaneseq
    %v29 = vshrl.u32 %v28, 7
    %v30 = vsub.s32 0, %v29
    %v31 = vrot.slane %v26, %v30
    %v35 = vunpack.c.l.b16 %v24
    %v36 = vunpack.c.l.b16 %v25
    %v37 = vpack.c.b16 %v36, %v35
    %vm39 = vcmask 130048
    %v41 = vsel %vm39, %v23, 0
    %43 = vmatprep.subr.bf16.mxu0 0
    %44 = vmatpush1.bf16.msra.mxu0 %v37
    %45 = vmatprep.subr.bf16.mxu0 0
    %46 = vmatpush1.bf16.msra.mxu0 0
    %47 = vmatprep.subr.bf16.mxu0 0
    %48 = vmatpush1.bf16.msra.mxu0 0
    %49 = vmatprep.subr.bf16.mxu0 0
    %50 = vmatpush1.bf16.msra.mxu0 0
    %51 = vmatprep.subr.bf16.mxu0 0
    %52 = vmatpush1.bf16.msra.mxu0 0
    %53 = vmatprep.subr.bf16.mxu0 0
    %54 = vmatpush1.bf16.msra.mxu0 0
    %55 = vmatprep.subr.bf16.mxu0 0
    %56 = vmatpush1.bf16.msra.mxu0 0
    %57 = vmatprep.subr.bf16.mxu0 0
    %58 = vmatpush1.bf16.msra.mxu0 0
    %59 = vmatprep.subr.bf16.mxu0 0
    %60 = vmatpush1.bf16.msra.mxu0 0
    %61 = vmatprep.subr.bf16.mxu0 0
    %62 = vmatpush1.bf16.msra.mxu0 0
    %63 = vmatprep.subr.bf16.mxu0 0
    %64 = vmatpush1.bf16.msra.mxu0 0
    %65 = vmatprep.subr.bf16.mxu0 0
    %66 = vmatpush1.bf16.msra.mxu0 0
    %67 = vmatprep.subr.bf16.mxu0 0
    %68 = vmatpush1.bf16.msra.mxu0 0
    %69 = vmatprep.subr.bf16.mxu0 0
    %70 = vmatpush1.bf16.msra.mxu0 0
    %71 = vmatprep.subr.bf16.mxu0 0
    %72 = vmatpush1.bf16.msra.mxu0 0
    %73 = vmatprep.subr.bf16.mxu0 0
    %74 = vmatpush1.bf16.msra.mxu0 0
    %75 = vmatprep.mubr.bf16.mxu0 0
    %76 = vmatmul.mubr.bf16.gmra.mrb[0].mxu0 %v41
    %v77 = vpop.f32.mrb[0].mxu0
    %v78 = vadd.f32 %v31, %v77
    %v79 = vpop.f32.mrb[0].mxu0
    %v80 = vpop.f32.mrb[0].mxu0
    %v81 = vpop.f32.mrb[0].mxu0
    %82 = vdwg.mxu0
    %v83 = vmax.f32 %v78, 0.0
    %v84 = vpack.c.bf16 %v83, %v83
    %v85 = vld [vmem:[%s3] sm:$0xf]
    %v86 = vld [vmem:[%s3 + $0x4] sm:$0xf]
    %v87 = vld [vmem:[%s3 + $0x8] sm:$0xf]
    %v88 = vld [vmem:[%s3 + $0xc] sm:$0xf]
    %v89 = vld [vmem:[%s3 + $0x10] sm:$0xf]
    %v90 = vld [vmem:[%s3 + $0x14] sm:$0xf]
    %v91 = vld [vmem:[%s3 + $0x18] sm:$0xf]
    %v92 = vld [vmem:[%s3 + $0x1c] sm:$0xf]
    %v93 = vld [vmem:[%s3 + $0x20] sm:$0xf]
    %v94 = vld [vmem:[%s3 + $0x24] sm:$0xf]
    %v95 = vld [vmem:[%s3 + $0x28] sm:$0xf]
    %v96 = vld [vmem:[%s3 + $0x2c] sm:$0xf]
    %v97 = vld [vmem:[%s3 + $0x30] sm:$0xf]
    %v98 = vld [vmem:[%s3 + $0x34] sm:$0xf]
    %v99 = vld [vmem:[%s3 + $0x38] sm:$0xf]
    %v100 = vld [vmem:[%s3 + $0x3c] sm:$0xf]
    %v101 = vld [vmem:[%s4] sm:$0x1]
    %v103 = vlaneseq
    %v104 = vshrl.u32 %v103, 7
    %v105 = vsub.s32 0, %v104
    %v106 = vrot.slane %v101, %v105
    %v124 = vunpack.c.l.b16 %v85
    %v125 = vunpack.c.l.b16 %v86
    %v126 = vunpack.c.l.b16 %v87
    %v127 = vunpack.c.l.b16 %v88
    %v128 = vunpack.c.l.b16 %v89
    %v129 = vunpack.c.l.b16 %v90
    %v130 = vunpack.c.l.b16 %v91
    %v131 = vunpack.c.l.b16 %v92
    %v132 = vunpack.c.l.b16 %v93
    %v133 = vunpack.c.l.b16 %v94
    %v134 = vunpack.c.l.b16 %v95
    %v135 = vunpack.c.l.b16 %v96
    %v136 = vunpack.c.l.b16 %v97
    %v137 = vunpack.c.l.b16 %v98
    %v138 = vunpack.c.l.b16 %v99
    %v139 = vunpack.c.l.b16 %v100
    %v140 = vpack.c.b16 %v125, %v124
    %v141 = vpack.c.b16 %v127, %v126
    %v142 = vpack.c.b16 %v129, %v128
    %v143 = vpack.c.b16 %v131, %v130
    %v144 = vpack.c.b16 %v133, %v132
    %v145 = vpack.c.b16 %v135, %v134
    %v146 = vpack.c.b16 %v137, %v136
    %v147 = vpack.c.b16 %v139, %v138
    %156 = vmatprep.subr.bf16.mxu0 0
    %157 = vmatpush1.bf16.msra.mxu0 %v140
    %158 = vmatprep.subr.bf16.mxu0 0
    %159 = vmatpush1.bf16.msra.mxu0 %v141
    %160 = vmatprep.subr.bf16.mxu0 0
    %161 = vmatpush1.bf16.msra.mxu0 %v142
    %162 = vmatprep.subr.bf16.mxu0 0
    %163 = vmatpush1.bf16.msra.mxu0 %v143
    %164 = vmatprep.subr.bf16.mxu0 0
    %165 = vmatpush1.bf16.msra.mxu0 %v144
    %166 = vmatprep.subr.bf16.mxu0 0
    %167 = vmatpush1.bf16.msra.mxu0 %v145
    %168 = vmatprep.subr.bf16.mxu0 0
    %169 = vmatpush1.bf16.msra.mxu0 %v146
    %170 = vmatprep.subr.bf16.mxu0 0
    %171 = vmatpush1.bf16.msra.mxu0 %v147
    %172 = vmatprep.subr.bf16.mxu0 0
    %173 = vmatpush1.bf16.msra.mxu0 0
    %174 = vmatprep.subr.bf16.mxu0 0
    %175 = vmatpush1.bf16.msra.mxu0 0
    %176 = vmatprep.subr.bf16.mxu0 0
    %177 = vmatpush1.bf16.msra.mxu0 0
    %178 = vmatprep.subr.bf16.mxu0 0
    %179 = vmatpush1.bf16.msra.mxu0 0
    %180 = vmatprep.subr.bf16.mxu0 0
    %181 = vmatpush1.bf16.msra.mxu0 0
    %182 = vmatprep.subr.bf16.mxu0 0
    %183 = vmatpush1.bf16.msra.mxu0 0
    %184 = vmatprep.subr.bf16.mxu0 0
    %185 = vmatpush1.bf16.msra.mxu0 0
    %186 = vmatprep.subr.bf16.mxu0 0
    %187 = vmatpush1.bf16.msra.mxu0 0
    %188 = vmatprep.mubr.bf16.mxu0 0
    %189 = vmatmul.mubr.bf16.gmra.mrb[0].mxu0 %v84
    %v190 = vpop.f32.mrb[0].mxu0
    %v191 = vadd.f32 %v106, %v190
    %v192 = vpop.f32.mrb[0].mxu0
    %v193 = vpop.f32.mrb[0].mxu0
    %v194 = vpop.f32.mrb[0].mxu0
    %195 = vdwg.mxu0
    %v196 = vtanh.pop %v191
    %vm197 = vcmask 58368
    %198 = vst.msk [vmem:[#allocation2] sm:$0x3] %vm197, %v196
    // Predicated region
    $region22: #{tpu_custom_call.1} parent=1 // pred_check
      _
    $region23: #{tpu_custom_call.1} parent=1 // pred_check_branch
      %200 = sbr.rel (0) target = $region25
    $region24: #{tpu_custom_call.1} parent=1 // pred_region
      %s202 = ssub.s32 32, 32
      %203 = vsyncadd [#allocation3], %s202
      %s205 = sshll.u32 [#allocation2], 4
      %s206 = int_to_ptr.vmem [resolvable:$true] %s205
      %208 = dma.vmem_to_hbm [thread:$0]  %s206, 32, %s5, [#allocation3]
    $region25: #{tpu_custom_call.1} parent=1 // pred_fallthru
      _
    // Predicated region
    $region26: #{tpu_custom_call.1} parent=1 // pred_check
      _
    $region27: #{tpu_custom_call.1} parent=1 // pred_check_branch
      %210 = sbr.rel (0) target = $region29
    $region28: #{tpu_custom_call.1} parent=1 // pred_region
      %211 = dma.done [#allocation3], 32
    $region29: #{tpu_custom_call.1} parent=1 // pred_fallthru
      _
    %212 = vsyncpa [#allocation3], 1

</llo_original>
